<compile_context>
chip_gen: v7x
topology: tpu7x:2x2x1
jax: 0.10.0
libtpu: 0.0.40
codegen_flags: <defaults>
</compile_context>

<pallas_src>
import math
from functools import partial

import numpy as np
import jax
import jax.numpy as jnp
from jax.experimental import pallas as pl
from jax.experimental.pallas import tpu as pltpu


# ----------------------------- filter design (numpy, parameter setup) -------

def _hz_to_erb(hz):
    EarQ = 9.26449
    minBW = 24.7
    return hz / EarQ + minBW


def design_gammatone_fir(freq, samplerate, order=4, numtaps=32,
                         band_width_factor=1.0):
    """FIR branch of scipy.signal.gammatone (matches the PyTorch reference)."""
    freq = float(freq)
    samplerate = float(samplerate)
    t = np.arange(numtaps) / samplerate
    bw = 1.019 * _hz_to_erb(freq) * band_width_factor
    b = t ** (order - 1) * np.exp(-2 * np.pi * bw * t)
    b = b * np.cos(2 * np.pi * freq * t)
    scale_factor = 2 * (2 * np.pi * bw) ** order
    scale_factor /= float(math.factorial(order - 1))
    scale_factor /= samplerate
    b = b * scale_factor
    return b.astype(np.float32)


def _round_up(a, b):
    return ((a + b - 1) // b) * b


def _cdiv(a, b):
    return -(-a // b)


def _tile_defaults():
    """(TB_target, TR_max) per TPU generation (fall back to the large tiles)."""
    try:
        kind = jax.devices()[0].device_kind.lower()
    except Exception:
        kind = ""
    if ("v2" in kind) or ("v3" in kind) or ("v4" in kind) or ("v5" in kind):
        # Smaller time tile -> the banded weight wastes fewer MXU MACs on the
        # weaker MXUs; still lane-dense (multiple of 128).
        return 256, 256
    # v6e / v7x: bigger tiles, fewer grid steps (per-step overhead ~0.35us).
    return 512, 512


# ----------------------------- Pallas kernel --------------------------------

def conv_kernel(p_ref, w_ref, o_ref):
    """One MXU matmul per tile: (TR, KB) @ (KB, TB) -> (TR, TB), f32 accum.

    p_ref : packed (batch*channel*time-tile) signal windows (bf16 by default).
    w_ref : banded, shift-invariant averaged-gammatone weight (grid resident).
    """
    o_ref[...] = jnp.dot(p_ref[...], w_ref[...],
                         preferred_element_type=jnp.float32).astype(o_ref.dtype)


# ----------------------------- jitted forward --------------------------------

@partial(jax.jit, static_argnames=("L", "M", "TB", "TR", "Q", "n_tiles"))
def _hearing_forward_impl(x, W, *, L, M, TB, TR, Q, n_tiles):
    B, C, N = x.shape
    R = B * C
    KB, _ = W.shape
    TAIL = KB - TB
    U = (Q + 1) * TB
    total_rows = R * Q
    rows_pad = TR * n_tiles
    cdt = W.dtype

    # Flip + zero-pad + cast: one fused, contiguous pass (no gather).
    # xfp[r, u] = x[r, N + L - 2 - u] for L-1 <= u <= N+L-2, else 0.
    x2d = x.reshape(R, N)
    xfp = jnp.pad(x2d[:, ::-1].astype(cdt),
                  ((0, 0), (L - 1, U - (N + L - 1))))

    # Window rows: row (r, q) = xfp[r, q*TB : q*TB + KB]; the TAIL overlap
    # comes from the next tile's first TAIL samples (static slices + concat).
    main = xfp[:, :Q * TB].reshape(R, Q, TB)
    nxt = xfp[:, TB:U].reshape(R, Q, TB)[:, :, :TAIL]
    P = jnp.concatenate([main, nxt], axis=-1).reshape(total_rows, KB)
    if rows_pad != total_rows:
        P = jnp.pad(P, ((0, rows_pad - total_rows), (0, 0)))

    cost = pl.CostEstimate(
        flops=2 * rows_pad * KB * TB,
        transcendentals=0,
        bytes_accessed=(rows_pad * KB * P.dtype.itemsize
                        + KB * TB * W.dtype.itemsize      # W counted once
                        + rows_pad * TB * 4),
    )

    out2d = pl.pallas_call(
        conv_kernel,
        out_shape=jax.ShapeDtypeStruct((rows_pad, TB), jnp.float32),
        grid_spec=pltpu.PrefetchScalarGridSpec(
            num_scalar_prefetch=0,
            grid=(n_tiles,),
            in_specs=[
                pl.BlockSpec((TR, KB), lambda i: (i, 0)),   # packed signal rows
                pl.BlockSpec((KB, TB), lambda i: (0, 0)),   # banded taps (resident)
            ],
            out_specs=pl.BlockSpec((TR, TB), lambda i: (i, 0)),
        ),
        compiler_params=pltpu.CompilerParams(
            dimension_semantics=("parallel",)),
        cost_estimate=cost,
    )(P, W)

    if rows_pad != total_rows:
        out2d = out2d[:total_rows]
    out = out2d.reshape(R, Q * TB)[:, :M]
    return out.reshape(B, C, M)


# ----------------------------- wrapper ---------------------------------------

def hearing_model_forward(x, filters_np, compute_dtype=jnp.bfloat16):
    """x: (B, C, N) float32 (NCW).  filters_np: (F, L) gammatone FIR taps."""
    B, C, N = x.shape
    _, L = filters_np.shape
    M = N + L - 1
    R = B * C

    # mean_f conv(xflip, h_f) == conv(xflip, mean_f h_f)   (exact linearity)
    h_avg = np.mean(np.asarray(filters_np, dtype=np.float64), axis=0)
    h_rev = h_avg[::-1].astype(np.float32)           # h_rev[s] = h_avg[L-1-s]

    # ---- tiling (generation aware) -------------------------------------------
    tb_target, tr_max = _tile_defaults()
    TB = min(tb_target, _round_up(M, 128))           # output lanes per tile
    TAIL = _round_up(L - 1, 8)
    if TAIL > TB:
        raise ValueError("gamma_numtaps too large for the chosen time tile")
    KB = TB + TAIL                                    # contraction length
    Q = _cdiv(M, TB)                                  # time tiles
    total_rows = R * Q

    ROW_ALIGN = 16                                    # bf16 sublane packing
    n_tiles = max(1, _cdiv(total_rows, tr_max))
    if n_tiles == 1 and total_rows >= 4 * ROW_ALIGN:
        n_tiles = 2                                   # let v7x's 2 cores share
    if n_tiles > 1 and n_tiles % 2:
        n_tiles += 1                                  # even split across cores
    TR = _round_up(_cdiv(total_rows, n_tiles), ROW_ALIGN)

    # Banded, shift-invariant weight:  W[u, j] = h_rev[u - j] for 0 <= u-j < L.
    Wnp = np.zeros((KB, TB), dtype=np.float32)
    j_idx = np.arange(TB)
    for s in range(L):
        Wnp[j_idx + s, j_idx] = h_rev[s]
    W = jnp.asarray(Wnp, dtype=compute_dtype)

    return _hearing_forward_impl(x, W, L=L, M=M, TB=TB, TR=TR, Q=Q,
                                 n_tiles=n_tiles)


# ----------------------------- demo / check ----------------------------------

if __name__ == "__main__":
    center_frequencies = [200.0, 500.0, 1000.0, 2000.0]
    samplerate = 8000.0
    gamma_numtaps = 32
    band_width_factor = 1.0

    filters = np.stack([
        design_gammatone_fir(fc, samplerate, order=4, numtaps=gamma_numtaps,
                             band_width_factor=band_width_factor)
        for fc in center_frequencies
    ])  # (F, L)

    def reference(x_np, filt, quant_dtype=None):
        """Average of the per-filter full convs of the flipped signal.

        By linearity (exact in f64) this equals a single conv with the
        averaged taps, which is what the kernel computes.  quant_dtype mirrors
        the kernel's input/weight cast so the bf16 path can be checked tightly
        (bf16 x bf16 MXU products are exact; accumulation is f32)."""
        h_avg = np.mean(np.asarray(filt, dtype=np.float64), axis=0)
        x64 = np.asarray(x_np, dtype=np.float64)
        if quant_dtype is not None:
            h32 = h_avg.astype(np.float32)
            h_avg = np.asarray(
                jnp.asarray(h32).astype(quant_dtype).astype(jnp.float64))
            x64 = np.asarray(
                jnp.asarray(x_np).astype(quant_dtype).astype(jnp.float64))
        Bq, Cq, Nq = x64.shape
        Lq = h_avg.shape[0]
        ref = np.zeros((Bq, Cq, Nq + Lq - 1), dtype=np.float64)
        for bb in range(Bq):
            for cc in range(Cq):
                ref[bb, cc] = np.convolve(x64[bb, cc, ::-1], h_avg, mode="full")
        return ref

    # Small configuration consistent with the module (conv1d in the reference
    # implies a single input channel).
    key = jax.random.PRNGKey(0)
    B, C, N = 2, 1, 64
    x = jax.random.normal(key, (B, C, N), dtype=jnp.float32)

    # 1) f32 compute path: tight structural check (single tile, grid = 1).
    out_f32 = jax.block_until_ready(
        hearing_model_forward(x, filters, compute_dtype=jnp.float32))
    assert out_f32.shape == (B, C, N + gamma_numtaps - 1)
    assert out_f32.dtype == jnp.float32
    np.testing.assert_allclose(np.asarray(out_f32, dtype=np.float64),
                               reference(np.asarray(x), filters),
                               atol=5e-4, rtol=5e-3)

    # 2) bf16 compute path (default) vs. a bf16-quantized reference.
    out_bf16 = jax.block_until_ready(hearing_model_forward(x, filters))
    assert out_bf16.shape == (B, C, N + gamma_numtaps - 1)
    np.testing.assert_allclose(np.asarray(out_bf16, dtype=np.float64),
                               reference(np.asarray(x), filters, jnp.bfloat16),
                               atol=3e-4, rtol=2e-3)

    # 3) Larger configuration exercising the multi-tile (grid > 1) path:
    #    320 packed rows -> 2 balanced tiles of 160, zero row padding.
    B2, C2, N2 = 8, 1, 20000
    x2 = jax.random.normal(jax.random.PRNGKey(1), (B2, C2, N2),
                           dtype=jnp.float32)
    out2 = jax.block_until_ready(hearing_model_forward(x2, filters))
    assert out2.shape == (B2, C2, N2 + gamma_numtaps - 1)
    assert out2.dtype == jnp.float32
    np.testing.assert_allclose(np.asarray(out2, dtype=np.float64),
                               reference(np.asarray(x2), filters, jnp.bfloat16),
                               atol=3e-4, rtol=2e-3)

    print("KERNEL_OK")
</pallas_src>

<mosaic_0001>
module attributes {stable_mosaic.version = 11 : i64} {
  func.func @conv_kernel(%arg0: i32, %arg1: memref<16x160xf32, #tpu.memory_space<vmem>>, %arg2: memref<160x128xf32, #tpu.memory_space<vmem>>, %arg3: memref<16x128xf32, #tpu.memory_space<vmem>>) attributes {dimension_semantics = [#tpu.dimension_semantics<parallel>], iteration_bounds = array<i64: 1>, scalar_prefetch = 0 : i64, scratch_operands = 0 : i64, tpu.core_type = #tpu.core_type<tc>, window_params = [{transform_indices = @transform_0, window_bounds = array<i64: 16, 160>}, {pipeline_mode = #tpu.pipeline_mode<synchronous>, transform_indices = @transform_1, window_bounds = array<i64: 160, 128>}, {transform_indices = @transform_2, window_bounds = array<i64: 16, 128>}]} {
    %c0 = arith.constant 0 : index
    %c0_0 = arith.constant 0 : index
    %0 = vector.load %arg1[%c0, %c0_0] : memref<16x160xf32, #tpu.memory_space<vmem>>, vector<16x160xf32>
    %c0_1 = arith.constant 0 : index
    %c0_2 = arith.constant 0 : index
    %1 = vector.load %arg2[%c0_1, %c0_2] : memref<160x128xf32, #tpu.memory_space<vmem>>, vector<160x128xf32>
    %cst = arith.constant dense<0.000000e+00> : vector<16x128xf32>
    %2 = tpu.matmul %0, %1, %cst {dimension_numbers = #tpu.dot_dimension_numbers<[1], [0], [0], [1], [0, 0, 1, 1], [], []>} : vector<16x160xf32>, vector<160x128xf32>, vector<16x128xf32> -> vector<16x128xf32>
    %c0_3 = arith.constant 0 : index
    %c0_4 = arith.constant 0 : index
    %3 = vector.load %arg3[%c0_3, %c0_4] : memref<16x128xf32, #tpu.memory_space<vmem>>, vector<16x128xf32>
    tpu.vector_store %arg3[%c0_3, %c0_4], %2 {strides = array<i32>} : memref<16x128xf32, #tpu.memory_space<vmem>>, vector<16x128xf32>,
    return
  }
  func.func @transform_0(%arg0: i32) -> (i32, i32) {
    %c0_i32 = arith.constant 0 : i32
    %c0_i32_0 = arith.constant 0 : i32
    return %arg0, %c0_i32 : i32, i32
  }
  func.func @transform_1(%arg0: i32) -> (i32, i32) {
    %c0_i32 = arith.constant 0 : i32
    %c0_i32_0 = arith.constant 0 : i32
    %c0_i32_1 = arith.constant 0 : i32
    return %c0_i32, %c0_i32_0 : i32, i32
  }
  func.func @transform_2(%arg0: i32) -> (i32, i32) {
    %c0_i32 = arith.constant 0 : i32
    %c0_i32_0 = arith.constant 0 : i32
    return %arg0, %c0_i32 : i32, i32
  }
}

</mosaic_0001>

<llo_original>
// kernel: _hearing_forward_impl.1
$region0: #{_hearing_forward_impl.1}
  #allocation0 [shape = 'u32[]', space=smem, size = 0x4, offset = 0x4, fixed_abs, tag = 'smem constant byte address 0x4 - core index']
  #allocation1 [shape = 'u32[144,128]{1,0:T(1,128)}', space=vmem, size = 0x12000, scoped, tag = 'internal scratch']
  %s0 = inlined_call_operand.vmem [shape: f32[16,160], index: 0, kind: input, shape index: {}]
  %s1 = inlined_call_operand.hbm [shape: f32[160,128], index: 1, kind: input, shape index: {}]
  %s2 = inlined_call_operand.vmem [shape: f32[16,128], index: 2, kind: output, shape index: {}]
  %s3 = sld [smem:[#allocation0]]
  $region22: #{_hearing_forward_impl.1} parent=0
    _
  %s5 = ssub.s32 1, %s3
  %s6 = scalar_select 0, %s5, %s3
  $region1: #{_hearing_forward_impl.1} parent=0
    #allocation2 [shape = 'u8[81920]{0}', space=vmem, size = 0x14000, scoped, tag = 'input window, operand 1, single buffered']
    #allocation3 [shape = 's32[1]{0}', space=sflag, size = 0x4, scoped, tag = 'scoped memory for _hearing_forward_impl.1']
    %7 = vsyncpa [#allocation3], 0
    // Predicated region
    $region2: #{_hearing_forward_impl.1} parent=1 // pred_check
      _
    $region3: #{_hearing_forward_impl.1} parent=1 // pred_check_branch
      %9 = sbr.rel (0) target = $region5
    $region4: #{_hearing_forward_impl.1} parent=1 // pred_region
      _
    $region5: #{_hearing_forward_impl.1} parent=1 // pred_fallthru
      _
    // Predicated region
    $region6: #{_hearing_forward_impl.1} parent=1 // pred_check
      _
    $region7: #{_hearing_forward_impl.1} parent=1 // pred_check_branch
      %11 = sbr.rel (0) target = $region9
    $region8: #{_hearing_forward_impl.1} parent=1 // pred_region
      %s13 = ssub.s32 2560, 2560
      %14 = vsyncadd [#allocation3], %s13
      %s15 = sshll.u32 [#allocation2], 4
      %s16 = int_to_ptr.vmem [resolvable:$true] %s15
      %21 = dma.hbm_to_vmem [thread:$0]  %s1, 2560, %s16, [#allocation3], 128, 128, 8
    $region9: #{_hearing_forward_impl.1} parent=1 // pred_fallthru
      _
    // Predicated region
    $region10: #{_hearing_forward_impl.1} parent=1 // pred_check
      _
    $region11: #{_hearing_forward_impl.1} parent=1 // pred_check_branch
      %23 = sbr.rel (0) target = $region13
    $region12: #{_hearing_forward_impl.1} parent=1 // pred_region
      %24 = dma.done [#allocation3], 2560
    $region13: #{_hearing_forward_impl.1} parent=1 // pred_fallthru
      _
    %v25 = vld [vmem:[%s0] sm:$0xff]
    %v26 = vld [vmem:[%s0 + $0x8] sm:$0xff]
    %v27 = vld [vmem:[%s0 + $0x10] sm:$0xff]
    %v28 = vld [vmem:[%s0 + $0x18] sm:$0xff]
    %v29 = vld [vmem:[#allocation2] sm:$0xff]
    %v30 = vld [vmem:[#allocation2 + $0x8] sm:$0xff]
    %v31 = vld [vmem:[#allocation2 + $0x10] sm:$0xff]
    %v32 = vld [vmem:[#allocation2 + $0x18] sm:$0xff]
    %v33 = vld [vmem:[#allocation2 + $0x20] sm:$0xff]
    %v34 = vld [vmem:[#allocation2 + $0x28] sm:$0xff]
    %v35 = vld [vmem:[#allocation2 + $0x30] sm:$0xff]
    %v36 = vld [vmem:[#allocation2 + $0x38] sm:$0xff]
    %v37 = vld [vmem:[#allocation2 + $0x40] sm:$0xff]
    %v38 = vld [vmem:[#allocation2 + $0x48] sm:$0xff]
    %v39 = vld [vmem:[#allocation2 + $0x50] sm:$0xff]
    %v40 = vld [vmem:[#allocation2 + $0x58] sm:$0xff]
    %v41 = vld [vmem:[#allocation2 + $0x60] sm:$0xff]
    %v42 = vld [vmem:[#allocation2 + $0x68] sm:$0xff]
    %v43 = vld [vmem:[#allocation2 + $0x70] sm:$0xff]
    %v44 = vld [vmem:[#allocation2 + $0x78] sm:$0xff]
    %v45 = vld [vmem:[#allocation2 + $0x80] sm:$0xff]
    %v46 = vld [vmem:[#allocation2 + $0x88] sm:$0xff]
    %v47 = vld [vmem:[#allocation2 + $0x90] sm:$0xff]
    %v48 = vld [vmem:[#allocation2 + $0x98] sm:$0xff]
    %vm49 = vcmask 261120
    %v51 = vsel %vm49, %v26, 0
    %v54 = vsel %vm49, %v28, 0
    %56 = vmatprep.subr.mxu0 0.0
    %57 = vmatpush1.msra.mxu0 %v29
    %58 = vmatprep.subr.mxu0 0.0
    %59 = vmatpush1.msra.mxu0 %v30
    %60 = vmatprep.subr.mxu0 0.0
    %61 = vmatpush1.msra.mxu0 %v31
    %62 = vmatprep.subr.mxu0 0.0
    %63 = vmatpush1.msra.mxu0 %v32
    %64 = vmatprep.subr.mxu0 0.0
    %65 = vmatpush1.msra.mxu0 %v33
    %66 = vmatprep.subr.mxu0 0.0
    %67 = vmatpush1.msra.mxu0 %v34
    %68 = vmatprep.subr.mxu0 0.0
    %69 = vmatpush1.msra.mxu0 %v35
    %70 = vmatprep.subr.mxu0 0.0
    %71 = vmatpush1.msra.mxu0 %v36
    %72 = vmatprep.subr.mxu0 0.0
    %73 = vmatpush1.msra.mxu0 %v37
    %74 = vmatprep.subr.mxu0 0.0
    %75 = vmatpush1.msra.mxu0 %v38
    %76 = vmatprep.subr.mxu0 0.0
    %77 = vmatpush1.msra.mxu0 %v39
    %78 = vmatprep.subr.mxu0 0.0
    %79 = vmatpush1.msra.mxu0 %v40
    %80 = vmatprep.subr.mxu0 0.0
    %81 = vmatpush1.msra.mxu0 %v41
    %82 = vmatprep.subr.mxu0 0.0
    %83 = vmatpush1.msra.mxu0 %v42
    %84 = vmatprep.subr.mxu0 0.0
    %85 = vmatpush1.msra.mxu0 %v43
    %86 = vmatprep.subr.mxu0 0.0
    %87 = vmatpush1.msra.mxu0 %v44
    %88 = vmatprep.subr.mxu0 0.0
    %89 = vmatpush1.msra.mxu0 %v45
    %90 = vmatprep.subr.mxu0 0.0
    %91 = vmatpush1.msra.mxu0 %v46
    %92 = vmatprep.subr.mxu0 0.0
    %93 = vmatpush1.msra.mxu0 %v47
    %94 = vmatprep.subr.mxu0 0.0
    %95 = vmatpush1.msra.mxu0 %v48
    %96 = vmatprep.subr.mxu0 0.0
    %97 = vmatpush1.msra.mxu0 0.0
    %98 = vmatprep.subr.mxu0 0.0
    %99 = vmatpush1.msra.mxu0 0.0
    %100 = vmatprep.subr.mxu0 0.0
    %101 = vmatpush1.msra.mxu0 0.0
    %102 = vmatprep.subr.mxu0 0.0
    %103 = vmatpush1.msra.mxu0 0.0
    %104 = vmatprep.subr.mxu0 0.0
    %105 = vmatpush1.msra.mxu0 0.0
    %106 = vmatprep.subr.mxu0 0.0
    %107 = vmatpush1.msra.mxu0 0.0
    %108 = vmatprep.subr.mxu0 0.0
    %109 = vmatpush1.msra.mxu0 0.0
    %110 = vmatprep.subr.mxu0 0.0
    %111 = vmatpush1.msra.mxu0 0.0
    %112 = vmatprep.subr.mxu0 0.0
    %113 = vmatpush1.msra.mxu0 0.0
    %114 = vmatprep.subr.mxu0 0.0
    %115 = vmatpush1.msra.mxu0 0.0
    %116 = vmatprep.subr.mxu0 0.0
    %117 = vmatpush1.msra.mxu0 0.0
    %118 = vmatprep.subr.mxu0 0.0
    %119 = vmatpush1.msra.mxu0 0.0
    %120 = vmatprep.mubr.f32.mxu0 %v51
    %121 = vmatmul.mubr.f32.gmra.mrb[0].mxu0 %v25
    %v122 = vpop.f32.mrb[0].mxu0
    %v123 = vadd.f32 0.0, %v122
    %v124 = vpop.f32.mrb[0].mxu0
    %125 = vmatprep.mubr.f32.mxu0 %v54
    %126 = vmatmul.mubr.f32.gmra.mrb[0].mxu0 %v27
    %v127 = vpop.f32.mrb[0].mxu0
    %v128 = vadd.f32 0.0, %v127
    %v129 = vpop.f32.mrb[0].mxu0
    %130 = vdwg.mxu0
    %131 = vst [vmem:[%s2] sm:$0xff] %v123
    %132 = vst [vmem:[%s2 + $0x8] sm:$0xff] %v128
    // Predicated region
    $region14: #{_hearing_forward_impl.1} parent=1 // pred_check
      _
    $region15: #{_hearing_forward_impl.1} parent=1 // pred_check_branch
      %134 = sbr.rel (0) target = $region17
    $region16: #{_hearing_forward_impl.1} parent=1 // pred_region
      _
    $region17: #{_hearing_forward_impl.1} parent=1 // pred_fallthru
      _
    // Predicated region
    $region18: #{_hearing_forward_impl.1} parent=1 // pred_check
      _
    $region19: #{_hearing_forward_impl.1} parent=1 // pred_check_branch
      %136 = sbr.rel (0) target = $region21
    $region20: #{_hearing_forward_impl.1} parent=1 // pred_region
      _
    $region21: #{_hearing_forward_impl.1} parent=1 // pred_fallthru
      _
    %137 = vsyncpa [#allocation3], 1

</llo_original>
